<compile_context>
chip_gen: v7x
topology: tpu7x:2x2x1
jax: 0.10.0
libtpu: 0.0.40
codegen_flags: <defaults>
</compile_context>

<pallas_src>
import jax
import jax.numpy as jnp
from jax.experimental import pallas as pl
from jax.experimental.pallas import tpu as pltpu


def _mlp_kernel(x_ref, w1_ref, b1_ref, w2_ref, b2_ref, w3_ref, b3_ref, o_ref):
    """x_ref: (2, TILE_B) VMEM block (features x batch-lanes).
    w*/b*: PyTorch-layout (out, in) weights and (out,) biases in SMEM.
    o_ref: (1, TILE_B) VMEM block."""
    x0 = x_ref[0:1, :]                      # (1, TILE_B)
    x1 = x_ref[1:2, :]                      # (1, TILE_B)

    # lin1: (8,2) @ (2,B) + b1, ReLU  -- unrolled VPU FMAs, scalars from SMEM.
    h1 = []
    for j in range(8):
        hj = w1_ref[j, 0] * x0 + w1_ref[j, 1] * x1 + b1_ref[j]
        h1.append(jnp.maximum(hj, 0.0))

    # lin2: (2,8) @ (8,B) + b2, ReLU
    h2 = []
    for i in range(2):
        acc = w2_ref[i, 0] * h1[0] + b2_ref[i]
        for j in range(1, 8):
            acc = acc + w2_ref[i, j] * h1[j]
        h2.append(jnp.maximum(acc, 0.0))

    # lin3: (1,2) @ (2,B) + b3, Sigmoid (exp -> EUP slot)
    z = w3_ref[0, 0] * h2[0] + w3_ref[0, 1] * h2[1] + b3_ref[0]
    o_ref[...] = jax.nn.sigmoid(z)


def _round_up(n, m):
    return ((n + m - 1) // m) * m


def mlp_forward(x, w1, b1, w2, b2, w3, b3, *, tile_b=2048):
    """x: (B, 2) float32 -> (B, 1) float32.

    Weights are in native PyTorch layout: w1 (8,2), w2 (2,8), w3 (1,2);
    biases b1 (8,), b2 (2,), b3 (1,).
    """
    B = x.shape[0]
    # Lane-dense tiling: tile is a multiple of 128 lanes (or the whole padded B).
    tile_b = min(tile_b, _round_up(B, 128))
    bp = _round_up(B, tile_b)

    # Batch onto the lane axis; zero-pad the ragged tail (sliced off afterwards).
    xt = jnp.pad(x.astype(jnp.float32), ((0, bp - B), (0, 0))).T  # (2, bp)

    smem = pl.BlockSpec(memory_space=pltpu.MemorySpace.SMEM)
    out = pl.pallas_call(
        _mlp_kernel,
        out_shape=jax.ShapeDtypeStruct((1, bp), jnp.float32),
        grid=(bp // tile_b,),
        in_specs=[
            pl.BlockSpec((2, tile_b), lambda i: (0, i)),   # x: streamed, pipelined
            smem, smem, smem, smem, smem, smem,             # 45 scalars, resident
        ],
        out_specs=pl.BlockSpec((1, tile_b), lambda i: (0, i)),
        compiler_params=pltpu.CompilerParams(
            dimension_semantics=("parallel",),              # megacore split on v7x
        ),
    )(xt, w1, b1, w2, b2, w3, b3)

    return out[0, :B].reshape(B, 1)


def init_params(key):
    """Deterministic params in PyTorch layout (out_features, in_features).

    lin1/lin2 use a kaiming-normal(fan_out, relu)-style init like the module;
    lin3 + biases use the default uniform(-1/sqrt(fan_in), 1/sqrt(fan_in)).
    (Values will not bit-match torch's RNG, only the init family / shapes.)
    """
    k1, k2, k3, kb1, kb2, kb3 = jax.random.split(key, 6)

    def kaiming_fan_out(k, out_f, in_f):
        std = (2.0 / out_f) ** 0.5
        return std * jax.random.normal(k, (out_f, in_f), jnp.float32)

    def default_uniform(k, shape, fan_in):
        bound = 1.0 / (fan_in ** 0.5)
        return jax.random.uniform(k, shape, jnp.float32, -bound, bound)

    w1 = kaiming_fan_out(k1, 8, 2)            # lin1.weight (8, 2)
    b1 = default_uniform(kb1, (8,), 2)        # lin1.bias
    w2 = kaiming_fan_out(k2, 2, 8)            # lin2.weight (2, 8)
    b2 = default_uniform(kb2, (2,), 8)        # lin2.bias
    w3 = default_uniform(k3, (1, 2), 2)       # lin3.weight (1, 2)
    b3 = default_uniform(kb3, (1,), 2)        # lin3.bias
    return w1, b1, w2, b2, w3, b3


def _reference(x, w1, b1, w2, b2, w3, b3):
    h1 = jnp.maximum(x @ w1.T + b1, 0.0)
    h2 = jnp.maximum(h1 @ w2.T + b2, 0.0)
    return jax.nn.sigmoid(h2 @ w3.T + b3)


if __name__ == "__main__":
    key = jax.random.PRNGKey(0)
    kx, kx2, kp = jax.random.split(key, 3)
    w1, b1, w2, b2, w3, b3 = init_params(kp)

    # Main case: multi-step grid (2 lane-dense tiles of 128).
    B = 256
    x = jax.random.normal(kx, (B, 2), jnp.float32)
    out = mlp_forward(x, w1, b1, w2, b2, w3, b3, tile_b=128)
    out = jax.block_until_ready(out)
    ref = _reference(x, w1, b1, w2, b2, w3, b3)
    assert out.shape == (B, 1)
    assert jnp.allclose(out, ref, atol=1e-5, rtol=1e-5)

    # Ragged / tiny-batch case exercises the padding path.
    B2 = 8
    x2 = jax.random.normal(kx2, (B2, 2), jnp.float32)
    out2 = jax.block_until_ready(mlp_forward(x2, w1, b1, w2, b2, w3, b3))
    ref2 = _reference(x2, w1, b1, w2, b2, w3, b3)
    assert out2.shape == (B2, 1)
    assert jnp.allclose(out2, ref2, atol=1e-5, rtol=1e-5)

    print("KERNEL_OK")
</pallas_src>

<mosaic_0001>
module attributes {stable_mosaic.version = 11 : i64} {
  func.func @_mlp_kernel(%arg0: i32, %arg1: memref<2x128xf32, #tpu.memory_space<vmem>>, %arg2: memref<8x2xf32, #tpu.memory_space<smem>>, %arg3: memref<8xf32, #tpu.memory_space<smem>>, %arg4: memref<2x8xf32, #tpu.memory_space<smem>>, %arg5: memref<2xf32, #tpu.memory_space<smem>>, %arg6: memref<1x2xf32, #tpu.memory_space<smem>>, %arg7: memref<1xf32, #tpu.memory_space<smem>>, %arg8: memref<1x128xf32, #tpu.memory_space<vmem>>) attributes {dimension_semantics = [#tpu.dimension_semantics<parallel>], iteration_bounds = array<i64: 2>, scalar_prefetch = 0 : i64, scratch_operands = 0 : i64, tpu.core_type = #tpu.core_type<tc>, window_params = [{transform_indices = @transform_0, window_bounds = array<i64: 2, 128>}, {transform_indices = @transform_1, window_bounds = array<i64: 8, 2>}, {transform_indices = @transform_2, window_bounds = array<i64: 8>}, {transform_indices = @transform_3, window_bounds = array<i64: 2, 8>}, {transform_indices = @transform_4, window_bounds = array<i64: 2>}, {transform_indices = @transform_5, window_bounds = array<i64: 1, 2>}, {transform_indices = @transform_6, window_bounds = array<i64: 1>}, {transform_indices = @transform_7, window_bounds = array<i64: 1, 128>}]} {
    %c0 = arith.constant 0 : index
    %c0_0 = arith.constant 0 : index
    %0 = vector.load %arg1[%c0, %c0_0] : memref<2x128xf32, #tpu.memory_space<vmem>>, vector<1x128xf32>
    %c1 = arith.constant 1 : index
    %c0_1 = arith.constant 0 : index
    %1 = vector.load %arg1[%c1, %c0_1] : memref<2x128xf32, #tpu.memory_space<vmem>>, vector<1x128xf32>
    %c0_2 = arith.constant 0 : index
    %c0_3 = arith.constant 0 : index
    %2 = memref.load %arg2[%c0_2, %c0_3] : memref<8x2xf32, #tpu.memory_space<smem>>
    %3 = vector.broadcast %2 : f32 to vector<1x128xf32>
    %4 = arith.mulf %3, %0 : vector<1x128xf32>
    %c0_4 = arith.constant 0 : index
    %c1_5 = arith.constant 1 : index
    %5 = memref.load %arg2[%c0_4, %c1_5] : memref<8x2xf32, #tpu.memory_space<smem>>
    %6 = vector.broadcast %5 : f32 to vector<1x128xf32>
    %7 = arith.mulf %6, %1 : vector<1x128xf32>
    %8 = arith.addf %4, %7 : vector<1x128xf32>
    %c0_6 = arith.constant 0 : index
    %9 = memref.load %arg3[%c0_6] : memref<8xf32, #tpu.memory_space<smem>>
    %10 = vector.broadcast %9 : f32 to vector<1x128xf32>
    %11 = arith.addf %8, %10 : vector<1x128xf32>
    %cst = arith.constant 0.000000e+00 : f32
    %12 = vector.broadcast %cst : f32 to vector<1x128xf32>
    %13 = arith.maximumf %11, %12 : vector<1x128xf32>
    %c1_7 = arith.constant 1 : index
    %c0_8 = arith.constant 0 : index
    %14 = memref.load %arg2[%c1_7, %c0_8] : memref<8x2xf32, #tpu.memory_space<smem>>
    %15 = vector.broadcast %14 : f32 to vector<1x128xf32>
    %16 = arith.mulf %15, %0 : vector<1x128xf32>
    %c1_9 = arith.constant 1 : index
    %c1_10 = arith.constant 1 : index
    %17 = memref.load %arg2[%c1_9, %c1_10] : memref<8x2xf32, #tpu.memory_space<smem>>
    %18 = vector.broadcast %17 : f32 to vector<1x128xf32>
    %19 = arith.mulf %18, %1 : vector<1x128xf32>
    %20 = arith.addf %16, %19 : vector<1x128xf32>
    %c1_11 = arith.constant 1 : index
    %21 = memref.load %arg3[%c1_11] : memref<8xf32, #tpu.memory_space<smem>>
    %22 = vector.broadcast %21 : f32 to vector<1x128xf32>
    %23 = arith.addf %20, %22 : vector<1x128xf32>
    %cst_12 = arith.constant 0.000000e+00 : f32
    %24 = vector.broadcast %cst_12 : f32 to vector<1x128xf32>
    %25 = arith.maximumf %23, %24 : vector<1x128xf32>
    %c2 = arith.constant 2 : index
    %c0_13 = arith.constant 0 : index
    %26 = memref.load %arg2[%c2, %c0_13] : memref<8x2xf32, #tpu.memory_space<smem>>
    %27 = vector.broadcast %26 : f32 to vector<1x128xf32>
    %28 = arith.mulf %27, %0 : vector<1x128xf32>
    %c2_14 = arith.constant 2 : index
    %c1_15 = arith.constant 1 : index
    %29 = memref.load %arg2[%c2_14, %c1_15] : memref<8x2xf32, #tpu.memory_space<smem>>
    %30 = vector.broadcast %29 : f32 to vector<1x128xf32>
    %31 = arith.mulf %30, %1 : vector<1x128xf32>
    %32 = arith.addf %28, %31 : vector<1x128xf32>
    %c2_16 = arith.constant 2 : index
    %33 = memref.load %arg3[%c2_16] : memref<8xf32, #tpu.memory_space<smem>>
    %34 = vector.broadcast %33 : f32 to vector<1x128xf32>
    %35 = arith.addf %32, %34 : vector<1x128xf32>
    %cst_17 = arith.constant 0.000000e+00 : f32
    %36 = vector.broadcast %cst_17 : f32 to vector<1x128xf32>
    %37 = arith.maximumf %35, %36 : vector<1x128xf32>
    %c3 = arith.constant 3 : index
    %c0_18 = arith.constant 0 : index
    %38 = memref.load %arg2[%c3, %c0_18] : memref<8x2xf32, #tpu.memory_space<smem>>
    %39 = vector.broadcast %38 : f32 to vector<1x128xf32>
    %40 = arith.mulf %39, %0 : vector<1x128xf32>
    %c3_19 = arith.constant 3 : index
    %c1_20 = arith.constant 1 : index
    %41 = memref.load %arg2[%c3_19, %c1_20] : memref<8x2xf32, #tpu.memory_space<smem>>
    %42 = vector.broadcast %41 : f32 to vector<1x128xf32>
    %43 = arith.mulf %42, %1 : vector<1x128xf32>
    %44 = arith.addf %40, %43 : vector<1x128xf32>
    %c3_21 = arith.constant 3 : index
    %45 = memref.load %arg3[%c3_21] : memref<8xf32, #tpu.memory_space<smem>>
    %46 = vector.broadcast %45 : f32 to vector<1x128xf32>
    %47 = arith.addf %44, %46 : vector<1x128xf32>
    %cst_22 = arith.constant 0.000000e+00 : f32
    %48 = vector.broadcast %cst_22 : f32 to vector<1x128xf32>
    %49 = arith.maximumf %47, %48 : vector<1x128xf32>
    %c4 = arith.constant 4 : index
    %c0_23 = arith.constant 0 : index
    %50 = memref.load %arg2[%c4, %c0_23] : memref<8x2xf32, #tpu.memory_space<smem>>
    %51 = vector.broadcast %50 : f32 to vector<1x128xf32>
    %52 = arith.mulf %51, %0 : vector<1x128xf32>
    %c4_24 = arith.constant 4 : index
    %c1_25 = arith.constant 1 : index
    %53 = memref.load %arg2[%c4_24, %c1_25] : memref<8x2xf32, #tpu.memory_space<smem>>
    %54 = vector.broadcast %53 : f32 to vector<1x128xf32>
    %55 = arith.mulf %54, %1 : vector<1x128xf32>
    %56 = arith.addf %52, %55 : vector<1x128xf32>
    %c4_26 = arith.constant 4 : index
    %57 = memref.load %arg3[%c4_26] : memref<8xf32, #tpu.memory_space<smem>>
    %58 = vector.broadcast %57 : f32 to vector<1x128xf32>
    %59 = arith.addf %56, %58 : vector<1x128xf32>
    %cst_27 = arith.constant 0.000000e+00 : f32
    %60 = vector.broadcast %cst_27 : f32 to vector<1x128xf32>
    %61 = arith.maximumf %59, %60 : vector<1x128xf32>
    %c5 = arith.constant 5 : index
    %c0_28 = arith.constant 0 : index
    %62 = memref.load %arg2[%c5, %c0_28] : memref<8x2xf32, #tpu.memory_space<smem>>
    %63 = vector.broadcast %62 : f32 to vector<1x128xf32>
    %64 = arith.mulf %63, %0 : vector<1x128xf32>
    %c5_29 = arith.constant 5 : index
    %c1_30 = arith.constant 1 : index
    %65 = memref.load %arg2[%c5_29, %c1_30] : memref<8x2xf32, #tpu.memory_space<smem>>
    %66 = vector.broadcast %65 : f32 to vector<1x128xf32>
    %67 = arith.mulf %66, %1 : vector<1x128xf32>
    %68 = arith.addf %64, %67 : vector<1x128xf32>
    %c5_31 = arith.constant 5 : index
    %69 = memref.load %arg3[%c5_31] : memref<8xf32, #tpu.memory_space<smem>>
    %70 = vector.broadcast %69 : f32 to vector<1x128xf32>
    %71 = arith.addf %68, %70 : vector<1x128xf32>
    %cst_32 = arith.constant 0.000000e+00 : f32
    %72 = vector.broadcast %cst_32 : f32 to vector<1x128xf32>
    %73 = arith.maximumf %71, %72 : vector<1x128xf32>
    %c6 = arith.constant 6 : index
    %c0_33 = arith.constant 0 : index
    %74 = memref.load %arg2[%c6, %c0_33] : memref<8x2xf32, #tpu.memory_space<smem>>
    %75 = vector.broadcast %74 : f32 to vector<1x128xf32>
    %76 = arith.mulf %75, %0 : vector<1x128xf32>
    %c6_34 = arith.constant 6 : index
    %c1_35 = arith.constant 1 : index
    %77 = memref.load %arg2[%c6_34, %c1_35] : memref<8x2xf32, #tpu.memory_space<smem>>
    %78 = vector.broadcast %77 : f32 to vector<1x128xf32>
    %79 = arith.mulf %78, %1 : vector<1x128xf32>
    %80 = arith.addf %76, %79 : vector<1x128xf32>
    %c6_36 = arith.constant 6 : index
    %81 = memref.load %arg3[%c6_36] : memref<8xf32, #tpu.memory_space<smem>>
    %82 = vector.broadcast %81 : f32 to vector<1x128xf32>
    %83 = arith.addf %80, %82 : vector<1x128xf32>
    %cst_37 = arith.constant 0.000000e+00 : f32
    %84 = vector.broadcast %cst_37 : f32 to vector<1x128xf32>
    %85 = arith.maximumf %83, %84 : vector<1x128xf32>
    %c7 = arith.constant 7 : index
    %c0_38 = arith.constant 0 : index
    %86 = memref.load %arg2[%c7, %c0_38] : memref<8x2xf32, #tpu.memory_space<smem>>
    %87 = vector.broadcast %86 : f32 to vector<1x128xf32>
    %88 = arith.mulf %87, %0 : vector<1x128xf32>
    %c7_39 = arith.constant 7 : index
    %c1_40 = arith.constant 1 : index
    %89 = memref.load %arg2[%c7_39, %c1_40] : memref<8x2xf32, #tpu.memory_space<smem>>
    %90 = vector.broadcast %89 : f32 to vector<1x128xf32>
    %91 = arith.mulf %90, %1 : vector<1x128xf32>
    %92 = arith.addf %88, %91 : vector<1x128xf32>
    %c7_41 = arith.constant 7 : index
    %93 = memref.load %arg3[%c7_41] : memref<8xf32, #tpu.memory_space<smem>>
    %94 = vector.broadcast %93 : f32 to vector<1x128xf32>
    %95 = arith.addf %92, %94 : vector<1x128xf32>
    %cst_42 = arith.constant 0.000000e+00 : f32
    %96 = vector.broadcast %cst_42 : f32 to vector<1x128xf32>
    %97 = arith.maximumf %95, %96 : vector<1x128xf32>
    %c0_43 = arith.constant 0 : index
    %c0_44 = arith.constant 0 : index
    %98 = memref.load %arg4[%c0_43, %c0_44] : memref<2x8xf32, #tpu.memory_space<smem>>
    %99 = vector.broadcast %98 : f32 to vector<1x128xf32>
    %100 = arith.mulf %99, %13 : vector<1x128xf32>
    %c0_45 = arith.constant 0 : index
    %101 = memref.load %arg5[%c0_45] : memref<2xf32, #tpu.memory_space<smem>>
    %102 = vector.broadcast %101 : f32 to vector<1x128xf32>
    %103 = arith.addf %100, %102 : vector<1x128xf32>
    %c0_46 = arith.constant 0 : index
    %c1_47 = arith.constant 1 : index
    %104 = memref.load %arg4[%c0_46, %c1_47] : memref<2x8xf32, #tpu.memory_space<smem>>
    %105 = vector.broadcast %104 : f32 to vector<1x128xf32>
    %106 = arith.mulf %105, %25 : vector<1x128xf32>
    %107 = arith.addf %103, %106 : vector<1x128xf32>
    %c0_48 = arith.constant 0 : index
    %c2_49 = arith.constant 2 : index
    %108 = memref.load %arg4[%c0_48, %c2_49] : memref<2x8xf32, #tpu.memory_space<smem>>
    %109 = vector.broadcast %108 : f32 to vector<1x128xf32>
    %110 = arith.mulf %109, %37 : vector<1x128xf32>
    %111 = arith.addf %107, %110 : vector<1x128xf32>
    %c0_50 = arith.constant 0 : index
    %c3_51 = arith.constant 3 : index
    %112 = memref.load %arg4[%c0_50, %c3_51] : memref<2x8xf32, #tpu.memory_space<smem>>
    %113 = vector.broadcast %112 : f32 to vector<1x128xf32>
    %114 = arith.mulf %113, %49 : vector<1x128xf32>
    %115 = arith.addf %111, %114 : vector<1x128xf32>
    %c0_52 = arith.constant 0 : index
    %c4_53 = arith.constant 4 : index
    %116 = memref.load %arg4[%c0_52, %c4_53] : memref<2x8xf32, #tpu.memory_space<smem>>
    %117 = vector.broadcast %116 : f32 to vector<1x128xf32>
    %118 = arith.mulf %117, %61 : vector<1x128xf32>
    %119 = arith.addf %115, %118 : vector<1x128xf32>
    %c0_54 = arith.constant 0 : index
    %c5_55 = arith.constant 5 : index
    %120 = memref.load %arg4[%c0_54, %c5_55] : memref<2x8xf32, #tpu.memory_space<smem>>
    %121 = vector.broadcast %120 : f32 to vector<1x128xf32>
    %122 = arith.mulf %121, %73 : vector<1x128xf32>
    %123 = arith.addf %119, %122 : vector<1x128xf32>
    %c0_56 = arith.constant 0 : index
    %c6_57 = arith.constant 6 : index
    %124 = memref.load %arg4[%c0_56, %c6_57] : memref<2x8xf32, #tpu.memory_space<smem>>
    %125 = vector.broadcast %124 : f32 to vector<1x128xf32>
    %126 = arith.mulf %125, %85 : vector<1x128xf32>
    %127 = arith.addf %123, %126 : vector<1x128xf32>
    %c0_58 = arith.constant 0 : index
    %c7_59 = arith.constant 7 : index
    %128 = memref.load %arg4[%c0_58, %c7_59] : memref<2x8xf32, #tpu.memory_space<smem>>
    %129 = vector.broadcast %128 : f32 to vector<1x128xf32>
    %130 = arith.mulf %129, %97 : vector<1x128xf32>
    %131 = arith.addf %127, %130 : vector<1x128xf32>
    %cst_60 = arith.constant 0.000000e+00 : f32
    %132 = vector.broadcast %cst_60 : f32 to vector<1x128xf32>
    %133 = arith.maximumf %131, %132 : vector<1x128xf32>
    %c1_61 = arith.constant 1 : index
    %c0_62 = arith.constant 0 : index
    %134 = memref.load %arg4[%c1_61, %c0_62] : memref<2x8xf32, #tpu.memory_space<smem>>
    %135 = vector.broadcast %134 : f32 to vector<1x128xf32>
    %136 = arith.mulf %135, %13 : vector<1x128xf32>
    %c1_63 = arith.constant 1 : index
    %137 = memref.load %arg5[%c1_63] : memref<2xf32, #tpu.memory_space<smem>>
    %138 = vector.broadcast %137 : f32 to vector<1x128xf32>
    %139 = arith.addf %136, %138 : vector<1x128xf32>
    %c1_64 = arith.constant 1 : index
    %c1_65 = arith.constant 1 : index
    %140 = memref.load %arg4[%c1_64, %c1_65] : memref<2x8xf32, #tpu.memory_space<smem>>
    %141 = vector.broadcast %140 : f32 to vector<1x128xf32>
    %142 = arith.mulf %141, %25 : vector<1x128xf32>
    %143 = arith.addf %139, %142 : vector<1x128xf32>
    %c1_66 = arith.constant 1 : index
    %c2_67 = arith.constant 2 : index
    %144 = memref.load %arg4[%c1_66, %c2_67] : memref<2x8xf32, #tpu.memory_space<smem>>
    %145 = vector.broadcast %144 : f32 to vector<1x128xf32>
    %146 = arith.mulf %145, %37 : vector<1x128xf32>
    %147 = arith.addf %143, %146 : vector<1x128xf32>
    %c1_68 = arith.constant 1 : index
    %c3_69 = arith.constant 3 : index
    %148 = memref.load %arg4[%c1_68, %c3_69] : memref<2x8xf32, #tpu.memory_space<smem>>
    %149 = vector.broadcast %148 : f32 to vector<1x128xf32>
    %150 = arith.mulf %149, %49 : vector<1x128xf32>
    %151 = arith.addf %147, %150 : vector<1x128xf32>
    %c1_70 = arith.constant 1 : index
    %c4_71 = arith.constant 4 : index
    %152 = memref.load %arg4[%c1_70, %c4_71] : memref<2x8xf32, #tpu.memory_space<smem>>
    %153 = vector.broadcast %152 : f32 to vector<1x128xf32>
    %154 = arith.mulf %153, %61 : vector<1x128xf32>
    %155 = arith.addf %151, %154 : vector<1x128xf32>
    %c1_72 = arith.constant 1 : index
    %c5_73 = arith.constant 5 : index
    %156 = memref.load %arg4[%c1_72, %c5_73] : memref<2x8xf32, #tpu.memory_space<smem>>
    %157 = vector.broadcast %156 : f32 to vector<1x128xf32>
    %158 = arith.mulf %157, %73 : vector<1x128xf32>
    %159 = arith.addf %155, %158 : vector<1x128xf32>
    %c1_74 = arith.constant 1 : index
    %c6_75 = arith.constant 6 : index
    %160 = memref.load %arg4[%c1_74, %c6_75] : memref<2x8xf32, #tpu.memory_space<smem>>
    %161 = vector.broadcast %160 : f32 to vector<1x128xf32>
    %162 = arith.mulf %161, %85 : vector<1x128xf32>
    %163 = arith.addf %159, %162 : vector<1x128xf32>
    %c1_76 = arith.constant 1 : index
    %c7_77 = arith.constant 7 : index
    %164 = memref.load %arg4[%c1_76, %c7_77] : memref<2x8xf32, #tpu.memory_space<smem>>
    %165 = vector.broadcast %164 : f32 to vector<1x128xf32>
    %166 = arith.mulf %165, %97 : vector<1x128xf32>
    %167 = arith.addf %163, %166 : vector<1x128xf32>
    %cst_78 = arith.constant 0.000000e+00 : f32
    %168 = vector.broadcast %cst_78 : f32 to vector<1x128xf32>
    %169 = arith.maximumf %167, %168 : vector<1x128xf32>
    %c0_79 = arith.constant 0 : index
    %c0_80 = arith.constant 0 : index
    %170 = memref.load %arg6[%c0_79, %c0_80] : memref<1x2xf32, #tpu.memory_space<smem>>
    %171 = vector.broadcast %170 : f32 to vector<1x128xf32>
    %172 = arith.mulf %171, %133 : vector<1x128xf32>
    %c0_81 = arith.constant 0 : index
    %c1_82 = arith.constant 1 : index
    %173 = memref.load %arg6[%c0_81, %c1_82] : memref<1x2xf32, #tpu.memory_space<smem>>
    %174 = vector.broadcast %173 : f32 to vector<1x128xf32>
    %175 = arith.mulf %174, %169 : vector<1x128xf32>
    %176 = arith.addf %172, %175 : vector<1x128xf32>
    %c0_83 = arith.constant 0 : index
    %177 = memref.load %arg7[%c0_83] : memref<1xf32, #tpu.memory_space<smem>>
    %178 = vector.broadcast %177 : f32 to vector<1x128xf32>
    %179 = arith.addf %176, %178 : vector<1x128xf32>
    %180 = arith.negf %179 : vector<1x128xf32>
    %181 = math.exp %180 : vector<1x128xf32>
    %cst_84 = arith.constant 1.000000e+00 : f32
    %182 = vector.broadcast %cst_84 : f32 to vector<1x128xf32>
    %183 = arith.addf %182, %181 : vector<1x128xf32>
    %184 = arith.divf %182, %183 : vector<1x128xf32>
    %c0_85 = arith.constant 0 : index
    %c0_86 = arith.constant 0 : index
    %185 = vector.load %arg8[%c0_85, %c0_86] : memref<1x128xf32, #tpu.memory_space<vmem>>, vector<1x128xf32>
    tpu.vector_store %arg8[%c0_85, %c0_86], %184 {strides = array<i32>} : memref<1x128xf32, #tpu.memory_space<vmem>>, vector<1x128xf32>,
    return
  }
  func.func @transform_0(%arg0: i32) -> (i32, i32) {
    %c0_i32 = arith.constant 0 : i32
    %c0_i32_0 = arith.constant 0 : i32
    return %c0_i32, %arg0 : i32, i32
  }
  func.func @transform_1(%arg0: i32) -> (i32, i32) {
    %c0_i32 = arith.constant 0 : i32
    %c0_i32_0 = arith.constant 0 : i32
    %c0_i32_1 = arith.constant 0 : i32
    return %c0_i32, %c0_i32_0 : i32, i32
  }
  func.func @transform_2(%arg0: i32) -> i32 {
    %c0_i32 = arith.constant 0 : i32
    %c0_i32_0 = arith.constant 0 : i32
    return %c0_i32 : i32
  }
  func.func @transform_3(%arg0: i32) -> (i32, i32) {
    %c0_i32 = arith.constant 0 : i32
    %c0_i32_0 = arith.constant 0 : i32
    %c0_i32_1 = arith.constant 0 : i32
    return %c0_i32, %c0_i32_0 : i32, i32
  }
  func.func @transform_4(%arg0: i32) -> i32 {
    %c0_i32 = arith.constant 0 : i32
    %c0_i32_0 = arith.constant 0 : i32
    return %c0_i32 : i32
  }
  func.func @transform_5(%arg0: i32) -> (i32, i32) {
    %c0_i32 = arith.constant 0 : i32
    %c0_i32_0 = arith.constant 0 : i32
    %c0_i32_1 = arith.constant 0 : i32
    return %c0_i32, %c0_i32_0 : i32, i32
  }
  func.func @transform_6(%arg0: i32) -> i32 {
    %c0_i32 = arith.constant 0 : i32
    %c0_i32_0 = arith.constant 0 : i32
    return %c0_i32 : i32
  }
  func.func @transform_7(%arg0: i32) -> (i32, i32) {
    %c0_i32 = arith.constant 0 : i32
    %c0_i32_0 = arith.constant 0 : i32
    return %c0_i32, %arg0 : i32, i32
  }
}

</mosaic_0001>

<llo_original>
// kernel: tpu_custom_call.1
$region0: #{tpu_custom_call.1}
  #allocation0 [shape = 'u32[]', space=smem, size = 0x4, offset = 0x4, fixed_abs, tag = 'smem constant byte address 0x4 - core index']
  #allocation1 [shape = 'u32[144,128]{1,0:T(1,128)}', space=vmem, size = 0x12000, scoped, tag = 'internal scratch']
  #allocation2 [shape = 'f32[1]{0:T(128)S(6)}', space=smem, size = 0x200, scoped, tag = 'scoped memory for tpu_custom_call.1']
  %s0 = inlined_call_operand.vmem [shape: f32[2,256], index: 0, kind: input, shape index: {}]
  %s1 = inlined_call_operand.vmem [shape: f32[8,2], index: 1, kind: input, shape index: {}]
  %s2 = inlined_call_operand.vmem [shape: f32[8], index: 2, kind: input, shape index: {}]
  %s3 = inlined_call_operand.vmem [shape: f32[2,8], index: 3, kind: input, shape index: {}]
  %s4 = inlined_call_operand.vmem [shape: f32[2], index: 4, kind: input, shape index: {}]
  %s5 = inlined_call_operand.vmem [shape: f32[1,2], index: 5, kind: input, shape index: {}]
  %s6 = inlined_call_operand.<no memory space> [shape: f32[1], index: 6, kind: input, shape index: {}]
  %s7 = inlined_call_operand.hbm [shape: f32[1,256], index: 7, kind: output, shape index: {}]
  %s8 = sld [smem:[#allocation0]]
  $region81: #{tpu_custom_call.1} parent=0
    _
  %s10 = ssub.s32 1, %s8
  %s11 = scalar_select 0, %s10, %s8
  %12 = sst [smem:[#allocation2]] %s6
  $region1: #{tpu_custom_call.1} parent=0
    #allocation3 [shape = 'u8[4096]{0}', space=smem, size = 0x1000, scoped, tag = 'input window, operand 1, single buffered']
    #allocation4 [shape = 's32[2]{0}', space=sflag, size = 0x8, scoped, tag = 'scoped memory for tpu_custom_call.1']
    #allocation5 [shape = 's32[2]{0}', space=sflag, size = 0x8, scoped, tag = 'scoped memory for tpu_custom_call.1']
    #allocation6 [shape = 'u8[512]{0}', space=smem, size = 0x200, scoped, tag = 'input window, operand 2, single buffered']
    #allocation7 [shape = 's32[1]{0}', space=sflag, size = 0x4, scoped, tag = 'scoped memory for tpu_custom_call.1']
    #allocation8 [shape = 'u8[1024]{0}', space=smem, size = 0x400, scoped, tag = 'input window, operand 3, single buffered']
    #allocation9 [shape = 'u8[512]{0}', space=smem, size = 0x200, scoped, tag = 'input window, operand 4, single buffered']
    #allocation10 [shape = 's32[1]{0}', space=sflag, size = 0x4, scoped, tag = 'scoped memory for tpu_custom_call.1']
    #allocation11 [shape = 'u8[512]{0}', space=smem, size = 0x200, scoped, tag = 'input window, operand 5, single buffered']
    #allocation12 [shape = 'u8[1024]{0}', space=vmem, size = 0x400, scoped, tag = 'output window, operand 0']
    %13 = vsyncpa [#allocation5], 0
    %14 = vsyncpa [#allocation7], 0
    %15 = vsyncpa [#allocation10], 0
    %16 = vsyncpa [#allocation4], 0
    %s17 = scalar_lea.sflag [#allocation4], 1
    %18 = vsyncpa %s17, 0
    loop: start=0, step=1, limit=4
    $region2: #{tpu_custom_call.1} parent=1 // loop_pre_header
      _
    $region3: #{tpu_custom_call.1} parent=1 // loop_header
      %s20 = sphi 0, %s24
      %p21 = scmp.ge.s32.totalorder %s20, 4
      %s30 = sphi 0, %s32
      %s33 = sphi 0, %s30
      %s34 = sphi 0, %s33
      %s50 = sphi 0, %s34
      %s54 = sphi 0, %s54
      %s56 = sphi 0, %s54
      %s57 = sphi 0, %s56
      %s71 = sphi 0, %s57
      %s75 = sphi 0, %s75
      %s77 = sphi 0, %s75
      %s78 = sphi 0, %s77
      %s92 = sphi 0, %s78
      %s96 = sphi 0, %s96
      %s98 = sphi 0, %s96
      %s99 = sphi 0, %s98
      %s113 = sphi 0, %s99
      %s117 = sphi 0, %s117
      %s119 = sphi 0, %s117
      %s120 = sphi 0, %s119
      %s134 = sphi 0, %s120
      %s138 = sphi 0, %s138
      %s140 = sphi 0, %s138
      %s141 = sphi 0, %s140
      %s155 = sphi 0, %s141
      %s159 = sphi 0, %s159
      %s161 = sphi 0, %s159
      %s162 = sphi 0, %s161
      %s176 = sphi 0, %s162
      %s182 = sphi 0, %s184
      %s185 = sphi 0, %s182
      %s186 = sphi 0, %s185
      %s202 = sphi 0, %s186
    $region4: #{tpu_custom_call.1} parent=1 // loop_header_branch
      %23 = sbr.rel (%p21) target = $region8
    $region5: #{tpu_custom_call.1} parent=1 // loop_body
      %s25 = ssub.s32 %s20, 1
      %s26 = ssub.s32 %s20, 2
      %s27 = sadd.s32 %s20, 1
      %s28 = ssub.s32 %s20, %s27
      %p29 = scmp.eq.s32.totalorder %s28, 0
      %s31 = sadd.s32 %s30, 1
      %s32 = scalar_select %p29, %s30, %s31
      %p35 = pneg %p29
      %p36 = scmp.eq.s32.totalorder %s20, 1
      %p37 = por %p35, %p36
      %p38 = scmp.ne.s32.totalorder %s30, %s33
      %p39 = scmp.eq.s32.totalorder %s20, 0
      %p40 = por %p38, %p39
      %p41 = scmp.ne.s32.totalorder %s30, %s33
      %p42 = scmp.eq.s32.totalorder %s25, 1
      %p43 = por %p41, %p42
      %p44 = scmp.ne.s32.totalorder %s33, %s34
      %p45 = scmp.eq.s32.totalorder %s25, 0
      %p46 = por %p44, %p45
      %p47 = scmp.ne.s32.totalorder %s33, %s34
      %p48 = scmp.eq.s32.totalorder %s26, 1
      %p49 = por %p47, %p48
      %p51 = scmp.ne.s32.totalorder %s34, %s50
      %p52 = scmp.eq.s32.totalorder %s26, 0
      %p53 = por %p51, %p52
      %s55 = sadd.s32 %s54, 1
      %p58 = scmp.eq.s32.totalorder %s20, 1
      %p59 = scmp.ne.s32.totalorder %s54, %s56
      %p60 = scmp.eq.s32.totalorder %s20, 0
      %p61 = por %p59, %p60
      %p62 = scmp.ne.s32.totalorder %s54, %s56
      %p63 = scmp.eq.s32.totalorder %s25, 1
      %p64 = por %p62, %p63
      %p65 = scmp.ne.s32.totalorder %s56, %s57
      %p66 = scmp.eq.s32.totalorder %s25, 0
      %p67 = por %p65, %p66
      %p68 = scmp.ne.s32.totalorder %s56, %s57
      %p69 = scmp.eq.s32.totalorder %s26, 1
      %p70 = por %p68, %p69
      %p72 = scmp.ne.s32.totalorder %s57, %s71
      %p73 = scmp.eq.s32.totalorder %s26, 0
      %p74 = por %p72, %p73
      %s76 = sadd.s32 %s75, 1
      %p79 = scmp.eq.s32.totalorder %s20, 1
      %p80 = scmp.ne.s32.totalorder %s75, %s77
      %p81 = scmp.eq.s32.totalorder %s20, 0
      %p82 = por %p80, %p81
      %p83 = scmp.ne.s32.totalorder %s75, %s77
      %p84 = scmp.eq.s32.totalorder %s25, 1
      %p85 = por %p83, %p84
      %p86 = scmp.ne.s32.totalorder %s77, %s78
      %p87 = scmp.eq.s32.totalorder %s25, 0
      %p88 = por %p86, %p87
      %p89 = scmp.ne.s32.totalorder %s77, %s78
      %p90 = scmp.eq.s32.totalorder %s26, 1
      %p91 = por %p89, %p90
      %p93 = scmp.ne.s32.totalorder %s78, %s92
      %p94 = scmp.eq.s32.totalorder %s26, 0
      %p95 = por %p93, %p94
      %s97 = sadd.s32 %s96, 1
      %p100 = scmp.eq.s32.totalorder %s20, 1
      %p101 = scmp.ne.s32.totalorder %s96, %s98
      %p102 = scmp.eq.s32.totalorder %s20, 0
      %p103 = por %p101, %p102
      %p104 = scmp.ne.s32.totalorder %s96, %s98
      %p105 = scmp.eq.s32.totalorder %s25, 1
      %p106 = por %p104, %p105
      %p107 = scmp.ne.s32.totalorder %s98, %s99
      %p108 = scmp.eq.s32.totalorder %s25, 0
      %p109 = por %p107, %p108
      %p110 = scmp.ne.s32.totalorder %s98, %s99
      %p111 = scmp.eq.s32.totalorder %s26, 1
      %p112 = por %p110, %p111
      %p114 = scmp.ne.s32.totalorder %s99, %s113
      %p115 = scmp.eq.s32.totalorder %s26, 0
      %p116 = por %p114, %p115
      %s118 = sadd.s32 %s117, 1
      %p121 = scmp.eq.s32.totalorder %s20, 1
      %p122 = scmp.ne.s32.totalorder %s117, %s119
      %p123 = scmp.eq.s32.totalorder %s20, 0
      %p124 = por %p122, %p123
      %p125 = scmp.ne.s32.totalorder %s117, %s119
      %p126 = scmp.eq.s32.totalorder %s25, 1
      %p127 = por %p125, %p126
      %p128 = scmp.ne.s32.totalorder %s119, %s120
      %p129 = scmp.eq.s32.totalorder %s25, 0
      %p130 = por %p128, %p129
      %p131 = scmp.ne.s32.totalorder %s119, %s120
      %p132 = scmp.eq.s32.totalorder %s26, 1
      %p133 = por %p131, %p132
      %p135 = scmp.ne.s32.totalorder %s120, %s134
      %p136 = scmp.eq.s32.totalorder %s26, 0
      %p137 = por %p135, %p136
      %s139 = sadd.s32 %s138, 1
      %p142 = scmp.eq.s32.totalorder %s20, 1
      %p143 = scmp.ne.s32.totalorder %s138, %s140
      %p144 = scmp.eq.s32.totalorder %s20, 0
      %p145 = por %p143, %p144
      %p146 = scmp.ne.s32.totalorder %s138, %s140
      %p147 = scmp.eq.s32.totalorder %s25, 1
      %p148 = por %p146, %p147
      %p149 = scmp.ne.s32.totalorder %s140, %s141
      %p150 = scmp.eq.s32.totalorder %s25, 0
      %p151 = por %p149, %p150
      %p152 = scmp.ne.s32.totalorder %s140, %s141
      %p153 = scmp.eq.s32.totalorder %s26, 1
      %p154 = por %p152, %p153
      %p156 = scmp.ne.s32.totalorder %s141, %s155
      %p157 = scmp.eq.s32.totalorder %s26, 0
      %p158 = por %p156, %p157
      %s160 = sadd.s32 %s159, 1
      %p163 = scmp.eq.s32.totalorder %s20, 1
      %p164 = scmp.ne.s32.totalorder %s159, %s161
      %p165 = scmp.eq.s32.totalorder %s20, 0
      %p166 = por %p164, %p165
      %p167 = scmp.ne.s32.totalorder %s159, %s161
      %p168 = scmp.eq.s32.totalorder %s25, 1
      %p169 = por %p167, %p168
      %p170 = scmp.ne.s32.totalorder %s161, %s162
      %p171 = scmp.eq.s32.totalorder %s25, 0
      %p172 = por %p170, %p171
      %p173 = scmp.ne.s32.totalorder %s161, %s162
      %p174 = scmp.eq.s32.totalorder %s26, 1
      %p175 = por %p173, %p174
      %p177 = scmp.ne.s32.totalorder %s162, %s176
      %p178 = scmp.eq.s32.totalorder %s26, 0
      %p179 = por %p177, %p178
      %s180 = ssub.s32 %s20, %s27
      %p181 = scmp.eq.s32.totalorder %s180, 0
      %s183 = sadd.s32 %s182, 1
      %s184 = scalar_select %p181, %s182, %s183
      %p187 = pneg %p181
      %p188 = scmp.eq.s32.totalorder %s20, 1
      %p189 = por %p187, %p188
      %p190 = scmp.ne.s32.totalorder %s182, %s185
      %p191 = scmp.eq.s32.totalorder %s20, 0
      %p192 = por %p190, %p191
      %p193 = scmp.ne.s32.totalorder %s182, %s185
      %p194 = scmp.eq.s32.totalorder %s25, 1
      %p195 = por %p193, %p194
      %p196 = scmp.ne.s32.totalorder %s185, %s186
      %p197 = scmp.eq.s32.totalorder %s25, 0
      %p198 = por %p196, %p197
      %p199 = scmp.ne.s32.totalorder %s185, %s186
      %p200 = scmp.eq.s32.totalorder %s26, 1
      %p201 = por %p199, %p200
      %p203 = scmp.ne.s32.totalorder %s186, %s202
      %p204 = scmp.eq.s32.totalorder %s26, 0
      %p205 = por %p203, %p204
      %p206 = scmp.le.s32.totalorder 1, %s20
      %p207 = scmp.lt.s32.totalorder %s20, 3
      %p208 = pnand %p206, %p207
      %p209 = pneg %p208
      // Predicated region
      $region9: #{tpu_custom_call.1} parent=5 // pred_check
        _
      $region10: #{tpu_custom_call.1} parent=5 // pred_check_branch
        %211 = sbr.rel (%p208) target = $region12
      $region11: #{tpu_custom_call.1} parent=5 // pred_region
        %s212 = ssub.s32 %s20, 1
        // Predicated region
        $region13: #{tpu_custom_call.1} parent=11 // pred_check
          %p213 = pneg %p67
        $region14: #{tpu_custom_call.1} parent=11 // pred_check_branch
          %215 = sbr.rel (%p213) target = $region16
        $region15: #{tpu_custom_call.1} parent=11 // pred_region
          %s217 = ssub.s32 128, 128
          %218 = vsyncadd [#allocation5], %s217
          %s220 = sshll.u32 %s1, 4
          %s221 = int_to_ptr.vmem [resolvable:$true] %s220
          %223 = dma.vmem_to_smem %s221, 128, [#allocation3], [#allocation5]
        $region16: #{tpu_custom_call.1} parent=11 // pred_fallthru
          _
        // Predicated region
        $region17: #{tpu_custom_call.1} parent=11 // pred_check
          %p224 = pneg %p88
        $region18: #{tpu_custom_call.1} parent=11 // pred_check_branch
          %226 = sbr.rel (%p224) target = $region20
        $region19: #{tpu_custom_call.1} parent=11 // pred_region
          %s228 = ssub.s32 16, 16
          %229 = vsyncadd [#allocation7], %s228
          %s231 = sshll.u32 %s2, 4
          %s232 = int_to_ptr.vmem [resolvable:$true] %s231
          %234 = dma.vmem_to_smem %s232, 16, [#allocation6], [#allocation7]
        $region20: #{tpu_custom_call.1} parent=11 // pred_fallthru
          _
        // Predicated region
        $region21: #{tpu_custom_call.1} parent=11 // pred_check
          %p235 = pneg %p109
        $region22: #{tpu_custom_call.1} parent=11 // pred_check_branch
          %237 = sbr.rel (%p235) target = $region24
        $region23: #{tpu_custom_call.1} parent=11 // pred_region
          %s239 = ssub.s32 32, 32
          %240 = vsyncadd [#allocation7], %s239
          %s242 = sshll.u32 %s3, 4
          %s243 = int_to_ptr.vmem [resolvable:$true] %s242
          %245 = dma.vmem_to_smem %s243, 32, [#allocation8], [#allocation7]
        $region24: #{tpu_custom_call.1} parent=11 // pred_fallthru
          _
        // Predicated region
        $region25: #{tpu_custom_call.1} parent=11 // pred_check
          %p246 = pneg %p130
        $region26: #{tpu_custom_call.1} parent=11 // pred_check_branch
          %248 = sbr.rel (%p246) target = $region28
        $region27: #{tpu_custom_call.1} parent=11 // pred_region
          %s250 = ssub.s32 16, 16
          %251 = vsyncadd [#allocation10], %s250
          %s253 = sshll.u32 %s4, 4
          %s254 = int_to_ptr.vmem [resolvable:$true] %s253
          %256 = dma.vmem_to_smem %s254, 16, [#allocation9], [#allocation10]
        $region28: #{tpu_custom_call.1} parent=11 // pred_fallthru
          _
        // Predicated region
        $region29: #{tpu_custom_call.1} parent=11 // pred_check
          %p257 = pneg %p151
        $region30: #{tpu_custom_call.1} parent=11 // pred_check_branch
          %259 = sbr.rel (%p257) target = $region32
        $region31: #{tpu_custom_call.1} parent=11 // pred_region
          %s261 = ssub.s32 16, 16
          %262 = vsyncadd [#allocation10], %s261
          %s264 = sshll.u32 %s5, 4
          %s265 = int_to_ptr.vmem [resolvable:$true] %s264
          %267 = dma.vmem_to_smem %s265, 16, [#allocation11], [#allocation10]
        $region32: #{tpu_custom_call.1} parent=11 // pred_fallthru
          _
        // Predicated region
        $region33: #{tpu_custom_call.1} parent=11 // pred_check
          %p268 = pneg %p172
        $region34: #{tpu_custom_call.1} parent=11 // pred_check_branch
          %270 = sbr.rel (%p268) target = $region36
        $region35: #{tpu_custom_call.1} parent=11 // pred_region
          _
        $region36: #{tpu_custom_call.1} parent=11 // pred_fallthru
          _
      $region12: #{tpu_custom_call.1} parent=5 // pred_fallthru
        _
      %p271 = scmp.lt.s32.totalorder %s20, 2
      // Predicated region
      $region37: #{tpu_custom_call.1} parent=5 // pred_check
        %p272 = pneg %p271
      $region38: #{tpu_custom_call.1} parent=5 // pred_check_branch
        %274 = sbr.rel (%p272) target = $region40
      $region39: #{tpu_custom_call.1} parent=5 // pred_region
        // Predicated region
        $region41: #{tpu_custom_call.1} parent=39 // pred_check
          %p275 = pneg %p40
        $region42: #{tpu_custom_call.1} parent=39 // pred_check_branch
          %277 = sbr.rel (%p275) target = $region44
        $region43: #{tpu_custom_call.1} parent=39 // pred_region
          %p278 = scmp.lt.s32.totalorder %s20, 1
          %s279 = scalar_select %p278, %s20, 1
          %s280 = smul.addr %s279, 2
          %s281 = scalar_lea.vmem %s0, %s280
        $region44: #{tpu_custom_call.1} parent=39 // pred_fallthru
          _
      $region40: #{tpu_custom_call.1} parent=5 // pred_fallthru
        _
      %p282 = scmp.le.s32.totalorder 1, %s20
      %p283 = scmp.lt.s32.totalorder %s20, 3
      %p284 = pnand %p282, %p283
      %p285 = pneg %p284
      // Predicated region
      $region45: #{tpu_custom_call.1} parent=5 // pred_check
        _
      $region46: #{tpu_custom_call.1} parent=5 // pred_check_branch
        %287 = sbr.rel (%p284) target = $region48
      $region47: #{tpu_custom_call.1} parent=5 // pred_region
        %s288 = ssub.s32 %s20, 1
        // Predicated region
        $region49: #{tpu_custom_call.1} parent=47 // pred_check
          %p289 = pneg %p67
        $region50: #{tpu_custom_call.1} parent=47 // pred_check_branch
          %291 = sbr.rel (%p289) target = $region52
        $region51: #{tpu_custom_call.1} parent=47 // pred_region
          %292 = dma.done [#allocation5], 128
        $region52: #{tpu_custom_call.1} parent=47 // pred_fallthru
          _
        // Predicated region
        $region53: #{tpu_custom_call.1} parent=47 // pred_check
          %p293 = pneg %p88
        $region54: #{tpu_custom_call.1} parent=47 // pred_check_branch
          %295 = sbr.rel (%p293) target = $region56
        $region55: #{tpu_custom_call.1} parent=47 // pred_region
          %296 = dma.done [#allocation7], 16
        $region56: #{tpu_custom_call.1} parent=47 // pred_fallthru
          _
        // Predicated region
        $region57: #{tpu_custom_call.1} parent=47 // pred_check
          %p297 = pneg %p109
        $region58: #{tpu_custom_call.1} parent=47 // pred_check_branch
          %299 = sbr.rel (%p297) target = $region60
        $region59: #{tpu_custom_call.1} parent=47 // pred_region
          %300 = dma.done [#allocation7], 32
        $region60: #{tpu_custom_call.1} parent=47 // pred_fallthru
          _
        // Predicated region
        $region61: #{tpu_custom_call.1} parent=47 // pred_check
          %p301 = pneg %p130
        $region62: #{tpu_custom_call.1} parent=47 // pred_check_branch
          %303 = sbr.rel (%p301) target = $region64
        $region63: #{tpu_custom_call.1} parent=47 // pred_region
          %304 = dma.done [#allocation10], 16
        $region64: #{tpu_custom_call.1} parent=47 // pred_fallthru
          _
        // Predicated region
        $region65: #{tpu_custom_call.1} parent=47 // pred_check
          %p305 = pneg %p151
        $region66: #{tpu_custom_call.1} parent=47 // pred_check_branch
          %307 = sbr.rel (%p305) target = $region68
        $region67: #{tpu_custom_call.1} parent=47 // pred_region
          %308 = dma.done [#allocation10], 16
        $region68: #{tpu_custom_call.1} parent=47 // pred_fallthru
          _
        %309 = sfence
        %p310 = scmp.lt.s32.totalorder %s25, 1
        %s311 = scalar_select %p310, %s25, 1
        %s312 = smul.addr %s311, 2
        %s313 = scalar_lea.vmem %s0, %s312
        %p314 = pneg %p46
        %p315 = pneg %p43
        %p316 = pneg %p67
        %p317 = pneg %p64
        %p318 = pneg %p88
        %p319 = pneg %p85
        %p320 = pneg %p109
        %p321 = pneg %p106
        %p322 = pneg %p130
        %p323 = pneg %p127
        %p324 = pneg %p151
        %p325 = pneg %p148
        %p326 = pneg %p172
        %p327 = pneg %p169
        %p328 = pneg %p198
        %p329 = pneg %p195
        %s330 = sand.u32 %s185, 1
        %s331 = scalar_lea.sflag [#allocation4], %s330
        %s332 = sand.u32 %s185, 1
        %s333 = scalar_lea.vmem [#allocation12], %s332
        %p334 = scmp.lt.s32.totalorder %s25, 1
        %s335 = scalar_select %p334, %s25, 1
        %s336 = smul.addr %s335, 2
        %s337 = scalar_lea.vmem %s0, %s336
        %v338 = vld [vmem:[%s337] sm:$0x1]
        %v339 = vld [vmem:[%s337 + $0x1] sm:$0x1]
        %s340 = sld [smem:[#allocation3]]
        %v341 = vstv %s340
        %v342 = vmul.f32 %v341, %v338
        %s343 = sld [smem:[#allocation3 + $0x1]]
        %v344 = vstv %s343
        %v345 = vmul.f32 %v344, %v339
        %v346 = vadd.f32 %v342, %v345
        %s347 = sld [smem:[#allocation6]]
        %v348 = vstv %s347
        %v349 = vadd.f32 %v346, %v348
        %v350 = vmax.f32 %v349, 0.0
        %s351 = sld [smem:[#allocation3 + $0x80]]
        %v352 = vstv %s351
        %v353 = vmul.f32 %v352, %v338
        %s354 = sld [smem:[#allocation3 + $0x81]]
        %v355 = vstv %s354
        %v356 = vmul.f32 %v355, %v339
        %v357 = vadd.f32 %v353, %v356
        %s358 = sld [smem:[#allocation6 + $0x1]]
        %v359 = vstv %s358
        %v360 = vadd.f32 %v357, %v359
        %v361 = vmax.f32 %v360, 0.0
        %s362 = sld [smem:[#allocation3 + $0x100]]
        %v363 = vstv %s362
        %v364 = vmul.f32 %v363, %v338
        %s365 = sld [smem:[#allocation3 + $0x101]]
        %v366 = vstv %s365
        %v367 = vmul.f32 %v366, %v339
        %v368 = vadd.f32 %v364, %v367
        %s369 = sld [smem:[#allocation6 + $0x2]]
        %v370 = vstv %s369
        %v371 = vadd.f32 %v368, %v370
        %v372 = vmax.f32 %v371, 0.0
        %s373 = sld [smem:[#allocation3 + $0x180]]
        %v374 = vstv %s373
        %v375 = vmul.f32 %v374, %v338
        %s376 = sld [smem:[#allocation3 + $0x181]]
        %v377 = vstv %s376
        %v378 = vmul.f32 %v377, %v339
        %v379 = vadd.f32 %v375, %v378
        %s380 = sld [smem:[#allocation6 + $0x3]]
        %v381 = vstv %s380
        %v382 = vadd.f32 %v379, %v381
        %v383 = vmax.f32 %v382, 0.0
        %s384 = sld [smem:[#allocation3 + $0x200]]
        %v385 = vstv %s384
        %v386 = vmul.f32 %v385, %v338
        %s387 = sld [smem:[#allocation3 + $0x201]]
        %v388 = vstv %s387
        %v389 = vmul.f32 %v388, %v339
        %v390 = vadd.f32 %v386, %v389
        %s391 = sld [smem:[#allocation6 + $0x4]]
        %v392 = vstv %s391
        %v393 = vadd.f32 %v390, %v392
        %v394 = vmax.f32 %v393, 0.0
        %s395 = sld [smem:[#allocation3 + $0x280]]
        %v396 = vstv %s395
        %v397 = vmul.f32 %v396, %v338
        %s398 = sld [smem:[#allocation3 + $0x281]]
        %v399 = vstv %s398
        %v400 = vmul.f32 %v399, %v339
        %v401 = vadd.f32 %v397, %v400
        %s402 = sld [smem:[#allocation6 + $0x5]]
        %v403 = vstv %s402
        %v404 = vadd.f32 %v401, %v403
        %v405 = vmax.f32 %v404, 0.0
        %s406 = sld [smem:[#allocation3 + $0x300]]
        %v407 = vstv %s406
        %v408 = vmul.f32 %v407, %v338
        %s409 = sld [smem:[#allocation3 + $0x301]]
        %v410 = vstv %s409
        %v411 = vmul.f32 %v410, %v339
        %v412 = vadd.f32 %v408, %v411
        %s413 = sld [smem:[#allocation6 + $0x6]]
        %v414 = vstv %s413
        %v415 = vadd.f32 %v412, %v414
        %v416 = vmax.f32 %v415, 0.0
        %s417 = sld [smem:[#allocation3 + $0x380]]
        %v418 = vstv %s417
        %v419 = vmul.f32 %v418, %v338
        %s420 = sld [smem:[#allocation3 + $0x381]]
        %v421 = vstv %s420
        %v422 = vmul.f32 %v421, %v339
        %v423 = vadd.f32 %v419, %v422
        %s424 = sld [smem:[#allocation6 + $0x7]]
        %v425 = vstv %s424
        %v426 = vadd.f32 %v423, %v425
        %v427 = vmax.f32 %v426, 0.0
        %s428 = sld [smem:[#allocation8]]
        %v429 = vstv %s428
        %v430 = vmul.f32 %v429, %v350
        %s431 = sld [smem:[#allocation9]]
        %v432 = vstv %s431
        %v433 = vadd.f32 %v430, %v432
        %s434 = sld [smem:[#allocation8 + $0x1]]
        %v435 = vstv %s434
        %v436 = vmul.f32 %v435, %v361
        %v437 = vadd.f32 %v433, %v436
        %s438 = sld [smem:[#allocation8 + $0x2]]
        %v439 = vstv %s438
        %v440 = vmul.f32 %v439, %v372
        %v441 = vadd.f32 %v437, %v440
        %s442 = sld [smem:[#allocation8 + $0x3]]
        %v443 = vstv %s442
        %v444 = vmul.f32 %v443, %v383
        %v445 = vadd.f32 %v441, %v444
        %s446 = sld [smem:[#allocation8 + $0x4]]
        %v447 = vstv %s446
        %v448 = vmul.f32 %v447, %v394
        %v449 = vadd.f32 %v445, %v448
        %s450 = sld [smem:[#allocation8 + $0x5]]
        %v451 = vstv %s450
        %v452 = vmul.f32 %v451, %v405
        %v453 = vadd.f32 %v449, %v452
        %s454 = sld [smem:[#allocation8 + $0x6]]
        %v455 = vstv %s454
        %v456 = vmul.f32 %v455, %v416
        %v457 = vadd.f32 %v453, %v456
        %s458 = sld [smem:[#allocation8 + $0x7]]
        %v459 = vstv %s458
        %v460 = vmul.f32 %v459, %v427
        %v461 = vadd.f32 %v457, %v460
        %v462 = vmax.f32 %v461, 0.0
        %s463 = sld [smem:[#allocation8 + $0x80]]
        %v464 = vstv %s463
        %v465 = vmul.f32 %v464, %v350
        %s466 = sld [smem:[#allocation9 + $0x1]]
        %v467 = vstv %s466
        %v468 = vadd.f32 %v465, %v467
        %s469 = sld [smem:[#allocation8 + $0x81]]
        %v470 = vstv %s469
        %v471 = vmul.f32 %v470, %v361
        %v472 = vadd.f32 %v468, %v471
        %s473 = sld [smem:[#allocation8 + $0x82]]
        %v474 = vstv %s473
        %v475 = vmul.f32 %v474, %v372
        %v476 = vadd.f32 %v472, %v475
        %s477 = sld [smem:[#allocation8 + $0x83]]
        %v478 = vstv %s477
        %v479 = vmul.f32 %v478, %v383
        %v480 = vadd.f32 %v476, %v479
        %s481 = sld [smem:[#allocation8 + $0x84]]
        %v482 = vstv %s481
        %v483 = vmul.f32 %v482, %v394
        %v484 = vadd.f32 %v480, %v483
        %s485 = sld [smem:[#allocation8 + $0x85]]
        %v486 = vstv %s485
        %v487 = vmul.f32 %v486, %v405
        %v488 = vadd.f32 %v484, %v487
        %s489 = sld [smem:[#allocation8 + $0x86]]
        %v490 = vstv %s489
        %v491 = vmul.f32 %v490, %v416
        %v492 = vadd.f32 %v488, %v491
        %s493 = sld [smem:[#allocation8 + $0x87]]
        %v494 = vstv %s493
        %v495 = vmul.f32 %v494, %v427
        %v496 = vadd.f32 %v492, %v495
        %v497 = vmax.f32 %v496, 0.0
        %s498 = sld [smem:[#allocation11]]
        %v499 = vstv %s498
        %v500 = vmul.f32 %v499, %v462
        %s501 = sld [smem:[#allocation11 + $0x1]]
        %v502 = vstv %s501
        %v503 = vmul.f32 %v502, %v497
        %v504 = vadd.f32 %v500, %v503
        %s505 = sld [smem:[#allocation2]]
        %v506 = vstv %s505
        %v507 = vadd.f32 %v504, %v506
        %v508 = vxor.u32 %v507, 2147483648
        %v509 = vmul.f32 %v508, 1.442695
        %v510 = vpow.pop %v509
        %v511 = vadd.f32 %v510, 1.0
        %v512 = vrcp.pop %v511
        %v513 = vmul.f32 1.0, %v512
        %514 = vst [vmem:[%s333] sm:$0x1] %v513
        %s515 = sand.u32 %s185, 1
        %s516 = scalar_lea.sflag [#allocation4], %s515
        %s517 = sand.u32 %s185, 1
        %s518 = scalar_lea.vmem [#allocation12], %s517
        // Predicated region
        $region69: #{tpu_custom_call.1} parent=47 // pred_check
          %p519 = pneg %p195
        $region70: #{tpu_custom_call.1} parent=47 // pred_check_branch
          %521 = sbr.rel (%p519) target = $region72
        $region71: #{tpu_custom_call.1} parent=47 // pred_region
          %s523 = ssub.s32 16, 16
          %524 = vsyncadd %s516, %s523
          %s525 = smul.addr %s25, 16
          %s526 = scalar_lea.hbm %s7, %s525
          %s528 = sshll.u32 %s518, 4
          %s529 = int_to_ptr.vmem [resolvable:$true] %s528
          %531 = dma.vmem_to_hbm [thread:$0]  %s529, 16, %s526, %s516
        $region72: #{tpu_custom_call.1} parent=47 // pred_fallthru
          _
      $region48: #{tpu_custom_call.1} parent=5 // pred_fallthru
        _
      %p532 = scmp.le.s32.totalorder 2, %s20
      // Predicated region
      $region73: #{tpu_custom_call.1} parent=5 // pred_check
        %p533 = pneg %p532
      $region74: #{tpu_custom_call.1} parent=5 // pred_check_branch
        %535 = sbr.rel (%p533) target = $region76
      $region75: #{tpu_custom_call.1} parent=5 // pred_region
        %s536 = ssub.s32 %s20, 2
        // Predicated region
        $region77: #{tpu_custom_call.1} parent=75 // pred_check
          %p537 = pneg %p201
        $region78: #{tpu_custom_call.1} parent=75 // pred_check_branch
          %539 = sbr.rel (%p537) target = $region80
        $region79: #{tpu_custom_call.1} parent=75 // pred_region
          %s540 = sand.u32 %s186, 1
          %s541 = scalar_lea.sflag [#allocation4], %s540
          %s542 = sand.u32 %s186, 1
          %s543 = scalar_lea.vmem [#allocation12], %s542
          %544 = dma.done %s541, 16
        $region80: #{tpu_custom_call.1} parent=75 // pred_fallthru
          _
      $region76: #{tpu_custom_call.1} parent=5 // pred_fallthru
        _
    $region6: #{tpu_custom_call.1} parent=1 // loop_footer
      %s24 = sadd.s32 1, %s20
    $region7: #{tpu_custom_call.1} parent=1 // loop_footer_branch
      %19 = sbr.rel target = $region3
    $region8: #{tpu_custom_call.1} parent=1 // loop_exit
      _
    %545 = vsyncpa [#allocation4], 1
    %s546 = scalar_lea.sflag [#allocation4], 1
    %547 = vsyncpa %s546, 1
    %548 = vsyncpa [#allocation5], 1
    %s549 = scalar_lea.sflag [#allocation5], 1
    %550 = vsyncpa %s549, 1
    %551 = vsyncpa [#allocation7], 1
    %552 = vsyncpa [#allocation10], 1

</llo_original>
